<compile_context>
chip_gen: v5e
topology: v5e:2x2
jax: 0.10.0
libtpu: 0.0.40
codegen_flags: <defaults>
</compile_context>

<pallas_src>
import jax
import jax.numpy as jnp
from jax.experimental import pallas as pl
from jax.experimental.pallas import tpu as pltpu


def _collapse_kernel(x_ref, w_ref, shift_ref, o_ref):
    # x_ref:     (Cin, TS)   spatial tile, channels on the sublane axis
    # w_ref:     (Cout, Cin) 1x1-conv weight with folded BN scale
    # shift_ref: (Cout, 1)   folded BN shift = beta - mean * scale
    # o_ref:     (Cout, TS)
    y = jnp.dot(w_ref[...], x_ref[...], preferred_element_type=jnp.float32)
    y = y + shift_ref[...]
    o_ref[...] = jnp.maximum(y, 0.0).astype(o_ref.dtype)


def conv2d_collapse(voxel_features, conv_weight, bn_gamma, bn_beta,
                    bn_mean, bn_var, *, eps=1e-5, tile_s=1024):
    """voxel_features: (B, C, Z, Y, X) float32; conv_weight: (Cout, Cin, 1, 1)."""
    B, C, Z, Y, X = voxel_features.shape
    Cin = C * Z
    Cout = conv_weight.shape[0]
    S = Y * X

    # --- glue (all free reshapes, no transposes) ----------------------------
    # (B, C, Z, Y, X) -> (B, Cin, S): contiguous flatten of (C,Z) and (Y,X).
    x3 = voxel_features.reshape(B, Cin, S)

    # Fold BN (eval mode) into the weight: y = (scale*W) @ x + shift
    scale = bn_gamma / jnp.sqrt(bn_var + eps)                 # (Cout,)
    w = conv_weight.reshape(Cout, Cin) * scale[:, None]       # (Cout, Cin)
    shift = (bn_beta - bn_mean * scale).reshape(Cout, 1)      # (Cout, 1)

    # --- spatial tile selection ---------------------------------------------
    # Lane-dense tiles: multiple of 128.  Cap so double-buffered in+out blocks
    # stay under a conservative 16 MiB budget (safe on v5e/v6e/v7x defaults).
    s128 = ((S + 127) // 128) * 128
    ts = min(tile_s, s128)
    ts = max(128, (ts // 128) * 128)
    bytes_per_col = (Cin + Cout) * 2 * 4          # 2x-buffered, f32
    max_ts = max(128, ((16 * 1024 * 1024 // bytes_per_col) // 128) * 128)
    ts = min(ts, max_ts)

    n_s = pl.cdiv(S, ts)
    S_pad = n_s * ts
    if S_pad != S:
        x3 = jnp.pad(x3, ((0, 0), (0, 0), (0, S_pad - S)))

    out3 = pl.pallas_call(
        _collapse_kernel,
        out_shape=jax.ShapeDtypeStruct((B, Cout, S_pad), voxel_features.dtype),
        grid_spec=pltpu.PrefetchScalarGridSpec(
            num_scalar_prefetch=0,
            grid=(B, n_s),
            in_specs=[
                pl.BlockSpec((None, Cin, ts), lambda b, s: (b, 0, s)),
                pl.BlockSpec((Cout, Cin), lambda b, s: (0, 0)),
                pl.BlockSpec((Cout, 1), lambda b, s: (0, 0)),
            ],
            out_specs=pl.BlockSpec((None, Cout, ts), lambda b, s: (b, 0, s)),
        ),
        compiler_params=pltpu.CompilerParams(
            dimension_semantics=("parallel", "parallel")),
    )(x3, w, shift)

    if S_pad != S:
        out3 = out3[:, :, :S]
    # (B, Cout, S) -> (B, Cout, Y, X): free reshape (no transpose).
    return out3.reshape(B, Cout, Y, X)


def _reference(voxel_features, conv_weight, bn_gamma, bn_beta, bn_mean, bn_var,
               eps=1e-5):
    B, C, Z, Y, X = voxel_features.shape
    Cin = C * Z
    Cout = conv_weight.shape[0]
    bev = voxel_features.reshape(B, Cin, Y, X)
    w = conv_weight.reshape(Cout, Cin)
    y = jnp.einsum('bchw,oc->bohw', bev, w)
    scale = bn_gamma / jnp.sqrt(bn_var + eps)
    y = y * scale[None, :, None, None] + (bn_beta - bn_mean * scale)[None, :, None, None]
    return jnp.maximum(y, 0.0)


if __name__ == "__main__":
    # small shapes consistent with the module:
    #   grid_size = (X, Y, Z) = (16, 16, 4), NUM_BEV_FEATURES = 4
    #   -> voxel_features (B, C, Z, Y, X) = (2, 4, 4, 16, 16)
    #   -> conv: in_channels = C*Z = 16, out_channels = C = 4, kernel_size=1
    B, C, Z, Y, X = 2, 4, 4, 16, 16
    Cin, Cout = C * Z, C

    key = jax.random.PRNGKey(0)
    k0, k1, k2, k3, k4, k5 = jax.random.split(key, 6)
    voxel_features = jax.random.normal(k0, (B, C, Z, Y, X), dtype=jnp.float32)
    conv_weight = jax.random.normal(k1, (Cout, Cin, 1, 1), dtype=jnp.float32) * 0.1
    bn_gamma = 1.0 + 0.1 * jax.random.normal(k2, (Cout,), dtype=jnp.float32)
    bn_beta = 0.1 * jax.random.normal(k3, (Cout,), dtype=jnp.float32)
    bn_mean = 0.1 * jax.random.normal(k4, (Cout,), dtype=jnp.float32)
    bn_var = jnp.abs(1.0 + 0.1 * jax.random.normal(k5, (Cout,), dtype=jnp.float32))

    out = conv2d_collapse(voxel_features, conv_weight, bn_gamma, bn_beta,
                          bn_mean, bn_var)
    out = jax.block_until_ready(out)

    ref = _reference(voxel_features, conv_weight, bn_gamma, bn_beta,
                     bn_mean, bn_var)
    assert out.shape == (B, Cout, Y, X), out.shape
    assert jnp.allclose(out, ref, atol=1e-4, rtol=1e-4), "mismatch vs reference"
    print("KERNEL_OK")
</pallas_src>

<mosaic_0001>
module attributes {stable_mosaic.version = 11 : i64} {
  func.func @_collapse_kernel(%arg0: i32, %arg1: i32, %arg2: memref<1x16x256xf32, #tpu.memory_space<vmem>>, %arg3: memref<4x16xf32, #tpu.memory_space<vmem>>, %arg4: memref<4x1xf32, #tpu.memory_space<vmem>>, %arg5: memref<1x4x256xf32, #tpu.memory_space<vmem>>) attributes {dimension_semantics = [#tpu.dimension_semantics<parallel>, #tpu.dimension_semantics<parallel>], iteration_bounds = array<i64: 2, 1>, scalar_prefetch = 0 : i64, scratch_operands = 0 : i64, tpu.core_type = #tpu.core_type<tc>, window_params = [{transform_indices = @transform_0, window_bounds = array<i64: 1, 16, 256>}, {pipeline_mode = #tpu.pipeline_mode<synchronous>, transform_indices = @transform_1, window_bounds = array<i64: 4, 16>}, {pipeline_mode = #tpu.pipeline_mode<synchronous>, transform_indices = @transform_2, window_bounds = array<i64: 4, 1>}, {transform_indices = @transform_3, window_bounds = array<i64: 1, 4, 256>}]} {
    %c0 = arith.constant 0 : index
    %c0_0 = arith.constant 0 : index
    %0 = vector.load %arg3[%c0, %c0_0] : memref<4x16xf32, #tpu.memory_space<vmem>>, vector<4x16xf32>
    %c0_1 = arith.constant 0 : index
    %c0_2 = arith.constant 0 : index
    %c0_3 = arith.constant 0 : index
    %1 = vector.load %arg2[%c0_1, %c0_2, %c0_3] : memref<1x16x256xf32, #tpu.memory_space<vmem>>, vector<1x16x256xf32>
    %2 = vector.shape_cast %1 : vector<1x16x256xf32> to vector<16x256xf32>
    %cst = arith.constant dense<0.000000e+00> : vector<4x256xf32>
    %3 = tpu.matmul %0, %2, %cst {dimension_numbers = #tpu.dot_dimension_numbers<[1], [0], [0], [1], [0, 0, 1, 1], [], []>} : vector<4x16xf32>, vector<16x256xf32>, vector<4x256xf32> -> vector<4x256xf32>
    %c0_4 = arith.constant 0 : index
    %c0_5 = arith.constant 0 : index
    %4 = vector.load %arg4[%c0_4, %c0_5] : memref<4x1xf32, #tpu.memory_space<vmem>>, vector<4x1xf32>
    %5 = vector.broadcast %4 : vector<4x1xf32> to vector<4x256xf32>
    %6 = arith.addf %3, %5 : vector<4x256xf32>
    %cst_6 = arith.constant 0.000000e+00 : f32
    %7 = vector.broadcast %cst_6 : f32 to vector<4x256xf32>
    %8 = arith.maximumf %6, %7 : vector<4x256xf32>
    %c0_7 = arith.constant 0 : index
    %c0_8 = arith.constant 0 : index
    %c0_9 = arith.constant 0 : index
    %9 = vector.load %arg5[%c0_7, %c0_8, %c0_9] : memref<1x4x256xf32, #tpu.memory_space<vmem>>, vector<1x4x256xf32>
    %10 = vector.shape_cast %9 : vector<1x4x256xf32> to vector<4x256xf32>
    %11 = vector.shape_cast %8 : vector<4x256xf32> to vector<1x4x256xf32>
    tpu.vector_store %arg5[%c0_7, %c0_8, %c0_9], %11 {strides = array<i32>} : memref<1x4x256xf32, #tpu.memory_space<vmem>>, vector<1x4x256xf32>,
    return
  }
  func.func @transform_0(%arg0: i32, %arg1: i32) -> (i32, i32, i32) {
    %c0_i32 = arith.constant 0 : i32
    %c0_i32_0 = arith.constant 0 : i32
    return %arg0, %c0_i32, %arg1 : i32, i32, i32
  }
  func.func @transform_1(%arg0: i32, %arg1: i32) -> (i32, i32) {
    %c0_i32 = arith.constant 0 : i32
    %c0_i32_0 = arith.constant 0 : i32
    %c0_i32_1 = arith.constant 0 : i32
    return %c0_i32, %c0_i32_0 : i32, i32
  }
  func.func @transform_2(%arg0: i32, %arg1: i32) -> (i32, i32) {
    %c0_i32 = arith.constant 0 : i32
    %c0_i32_0 = arith.constant 0 : i32
    %c0_i32_1 = arith.constant 0 : i32
    return %c0_i32, %c0_i32_0 : i32, i32
  }
  func.func @transform_3(%arg0: i32, %arg1: i32) -> (i32, i32, i32) {
    %c0_i32 = arith.constant 0 : i32
    %c0_i32_0 = arith.constant 0 : i32
    return %arg0, %c0_i32, %arg1 : i32, i32, i32
  }
}

</mosaic_0001>

<llo_original>
// kernel: tpu_custom_call.1
$region0: #{tpu_custom_call.1}
  #allocation0 [shape = 'u32[]', space=smem, size = 0x4, offset = 0x4, fixed_abs, tag = 'smem constant byte address 0x4 - core index']
  #allocation1 [shape = 'u32[72,128]{1,0:T(1,128)}', space=vmem, size = 0x9000, scoped, tag = 'internal scratch']
  %s0 = inlined_call_operand.hbm [shape: f32[2,16,256], index: 0, kind: input, shape index: {}]
  %s1 = inlined_call_operand.vmem [shape: f32[4,16], index: 1, kind: input, shape index: {}]
  %s2 = inlined_call_operand.vmem [shape: f32[4,1], index: 2, kind: input, shape index: {}]
  %s3 = inlined_call_operand.hbm [shape: f32[2,4,256], index: 3, kind: output, shape index: {}]
  %s4 = sld [smem:[#allocation0]]
  $region49: #{tpu_custom_call.1} parent=0
    _
  %s6 = ssub.s32 1, %s4
  %s7 = scalar_select 0, %s6, %s4
  $region1: #{tpu_custom_call.1} parent=0
    #allocation2 [shape = 'u8[32768]{0}', space=vmem, size = 0x8000, scoped, tag = 'input window, operand 0']
    #allocation3 [shape = 's32[2]{0}', space=sflag, size = 0x8, scoped, tag = 'scoped memory for tpu_custom_call.1']
    #allocation4 [shape = 's32[2]{0}', space=sflag, size = 0x8, scoped, tag = 'scoped memory for tpu_custom_call.1']
    #allocation5 [shape = 'u8[8192]{0}', space=vmem, size = 0x2000, scoped, tag = 'output window, operand 0']
    %8 = vsyncpa [#allocation3], 0
    %s9 = scalar_lea.sflag [#allocation3], 1
    %10 = vsyncpa %s9, 0
    %11 = vsyncpa [#allocation4], 0
    %s12 = scalar_lea.sflag [#allocation4], 1
    %13 = vsyncpa %s12, 0
    loop: start=0, step=1, limit=4
    $region2: #{tpu_custom_call.1} parent=1 // loop_pre_header
      _
    $region3: #{tpu_custom_call.1} parent=1 // loop_header
      %s15 = sphi 0, %s19
      %p16 = scmp.ge.s32.totalorder %s15, 4
      %s22 = sphi 0, %s34
      %s23 = sphi 0, %s30
      %s24 = sphi 0, %s22
      %s25 = sphi 0, %s23
      %s26 = sphi 0, %s24
      %s27 = sphi 0, %s25
      %s39 = sphi 0, %s41
      %s42 = sphi 0, %s39
      %s43 = sphi 0, %s42
      %s59 = sphi 0, %s43
      %s63 = sphi 0, %s63
      %s65 = sphi 0, %s63
      %s66 = sphi 0, %s65
      %s80 = sphi 0, %s66
      %s84 = sphi 0, %s84
      %s86 = sphi 0, %s84
      %s87 = sphi 0, %s86
      %s101 = sphi 0, %s87
      %s109 = sphi 0, %s111
      %s112 = sphi 0, %s109
      %s113 = sphi 0, %s112
      %s129 = sphi 0, %s113
    $region4: #{tpu_custom_call.1} parent=1 // loop_header_branch
      %18 = sbr.rel (%p16) target = $region8
    $region5: #{tpu_custom_call.1} parent=1 // loop_body
      %s20 = ssub.s32 %s15, 1
      %s21 = ssub.s32 %s15, 2
      %s28 = sadd.s32 1, %s23
      %p29 = scmp.ge.s32.totalorder %s28, 1
      %s30 = scalar_select %p29, 0, %s28
      %s31 = sadd.s32 1, %s22
      %s32 = scalar_select %p29, %s31, %s22
      %p33 = scmp.ge.s32.totalorder %s32, 2
      %s34 = scalar_select %p33, 0, %s32
      %s35 = ssub.s32 %s22, %s34
      %s36 = ssub.s32 %s23, %s30
      %s37 = sor.u32 %s35, %s36
      %p38 = scmp.eq.s32.totalorder %s37, 0
      %s40 = sadd.s32 %s39, 1
      %s41 = scalar_select %p38, %s39, %s40
      %p44 = pneg %p38
      %p45 = scmp.eq.s32.totalorder %s15, 1
      %p46 = por %p44, %p45
      %p47 = scmp.ne.s32.totalorder %s39, %s42
      %p48 = scmp.eq.s32.totalorder %s15, 0
      %p49 = por %p47, %p48
      %p50 = scmp.ne.s32.totalorder %s39, %s42
      %p51 = scmp.eq.s32.totalorder %s20, 1
      %p52 = por %p50, %p51
      %p53 = scmp.ne.s32.totalorder %s42, %s43
      %p54 = scmp.eq.s32.totalorder %s20, 0
      %p55 = por %p53, %p54
      %p56 = scmp.ne.s32.totalorder %s42, %s43
      %p57 = scmp.eq.s32.totalorder %s21, 1
      %p58 = por %p56, %p57
      %p60 = scmp.ne.s32.totalorder %s43, %s59
      %p61 = scmp.eq.s32.totalorder %s21, 0
      %p62 = por %p60, %p61
      %s64 = sadd.s32 %s63, 1
      %p67 = scmp.eq.s32.totalorder %s15, 1
      %p68 = scmp.ne.s32.totalorder %s63, %s65
      %p69 = scmp.eq.s32.totalorder %s15, 0
      %p70 = por %p68, %p69
      %p71 = scmp.ne.s32.totalorder %s63, %s65
      %p72 = scmp.eq.s32.totalorder %s20, 1
      %p73 = por %p71, %p72
      %p74 = scmp.ne.s32.totalorder %s65, %s66
      %p75 = scmp.eq.s32.totalorder %s20, 0
      %p76 = por %p74, %p75
      %p77 = scmp.ne.s32.totalorder %s65, %s66
      %p78 = scmp.eq.s32.totalorder %s21, 1
      %p79 = por %p77, %p78
      %p81 = scmp.ne.s32.totalorder %s66, %s80
      %p82 = scmp.eq.s32.totalorder %s21, 0
      %p83 = por %p81, %p82
      %s85 = sadd.s32 %s84, 1
      %p88 = scmp.eq.s32.totalorder %s15, 1
      %p89 = scmp.ne.s32.totalorder %s84, %s86
      %p90 = scmp.eq.s32.totalorder %s15, 0
      %p91 = por %p89, %p90
      %p92 = scmp.ne.s32.totalorder %s84, %s86
      %p93 = scmp.eq.s32.totalorder %s20, 1
      %p94 = por %p92, %p93
      %p95 = scmp.ne.s32.totalorder %s86, %s87
      %p96 = scmp.eq.s32.totalorder %s20, 0
      %p97 = por %p95, %p96
      %p98 = scmp.ne.s32.totalorder %s86, %s87
      %p99 = scmp.eq.s32.totalorder %s21, 1
      %p100 = por %p98, %p99
      %p102 = scmp.ne.s32.totalorder %s87, %s101
      %p103 = scmp.eq.s32.totalorder %s21, 0
      %p104 = por %p102, %p103
      %s105 = ssub.s32 %s22, %s34
      %s106 = ssub.s32 %s23, %s30
      %s107 = sor.u32 %s105, %s106
      %p108 = scmp.eq.s32.totalorder %s107, 0
      %s110 = sadd.s32 %s109, 1
      %s111 = scalar_select %p108, %s109, %s110
      %p114 = pneg %p108
      %p115 = scmp.eq.s32.totalorder %s15, 1
      %p116 = por %p114, %p115
      %p117 = scmp.ne.s32.totalorder %s109, %s112
      %p118 = scmp.eq.s32.totalorder %s15, 0
      %p119 = por %p117, %p118
      %p120 = scmp.ne.s32.totalorder %s109, %s112
      %p121 = scmp.eq.s32.totalorder %s20, 1
      %p122 = por %p120, %p121
      %p123 = scmp.ne.s32.totalorder %s112, %s113
      %p124 = scmp.eq.s32.totalorder %s20, 0
      %p125 = por %p123, %p124
      %p126 = scmp.ne.s32.totalorder %s112, %s113
      %p127 = scmp.eq.s32.totalorder %s21, 1
      %p128 = por %p126, %p127
      %p130 = scmp.ne.s32.totalorder %s113, %s129
      %p131 = scmp.eq.s32.totalorder %s21, 0
      %p132 = por %p130, %p131
      %p133 = scmp.le.s32.totalorder 1, %s15
      %p134 = scmp.lt.s32.totalorder %s15, 3
      %p135 = pnand %p133, %p134
      %p136 = pneg %p135
      // Predicated region
      $region9: #{tpu_custom_call.1} parent=5 // pred_check
        _
      $region10: #{tpu_custom_call.1} parent=5 // pred_check_branch
        %138 = sbr.rel (%p135) target = $region12
      $region11: #{tpu_custom_call.1} parent=5 // pred_region
        %s139 = ssub.s32 %s15, 1
        // Predicated region
        $region13: #{tpu_custom_call.1} parent=11 // pred_check
          %p140 = pneg %p76
        $region14: #{tpu_custom_call.1} parent=11 // pred_check_branch
          %142 = sbr.rel (%p140) target = $region16
        $region15: #{tpu_custom_call.1} parent=11 // pred_region
          _
        $region16: #{tpu_custom_call.1} parent=11 // pred_fallthru
          _
        // Predicated region
        $region17: #{tpu_custom_call.1} parent=11 // pred_check
          %p143 = pneg %p97
        $region18: #{tpu_custom_call.1} parent=11 // pred_check_branch
          %145 = sbr.rel (%p143) target = $region20
        $region19: #{tpu_custom_call.1} parent=11 // pred_region
          _
        $region20: #{tpu_custom_call.1} parent=11 // pred_fallthru
          _
      $region12: #{tpu_custom_call.1} parent=5 // pred_fallthru
        _
      %p146 = scmp.lt.s32.totalorder %s15, 2
      // Predicated region
      $region21: #{tpu_custom_call.1} parent=5 // pred_check
        %p147 = pneg %p146
      $region22: #{tpu_custom_call.1} parent=5 // pred_check_branch
        %149 = sbr.rel (%p147) target = $region24
      $region23: #{tpu_custom_call.1} parent=5 // pred_region
        // Predicated region
        $region25: #{tpu_custom_call.1} parent=23 // pred_check
          %p150 = pneg %p49
        $region26: #{tpu_custom_call.1} parent=23 // pred_check_branch
          %152 = sbr.rel (%p150) target = $region28
        $region27: #{tpu_custom_call.1} parent=23 // pred_region
          %s153 = sand.u32 %s39, 1
          %s154 = scalar_lea.sflag [#allocation3], %s153
          %s155 = sand.u32 %s39, 1
          %s156 = smul.addr %s155, 32
          %s157 = scalar_lea.vmem [#allocation2], %s156
          %s158 = smul.u32 2, %s23
          %160 = vsyncadd %s154, 0
          %s161 = smul.addr %s22, 4
          %s162 = sadd.s32 %s158, %s161
          %s163 = smul.addr %s162, 8
          %s164 = scalar_lea.hbm %s0, %s163
          %s165 = sshll.u32 %s164, 4
          %s166 = int_to_ptr.hbm [resolvable:$true] %s165
          %s167 = sshll.u32 %s157, 4
          %s168 = int_to_ptr.vmem [resolvable:$true] %s167
          %173 = dma.hbm_to_vmem [thread:$0]  %s166, 512, %s168, %s154, 256, 256, 16
        $region28: #{tpu_custom_call.1} parent=23 // pred_fallthru
          _
      $region24: #{tpu_custom_call.1} parent=5 // pred_fallthru
        _
      %p174 = scmp.le.s32.totalorder 1, %s15
      %p175 = scmp.lt.s32.totalorder %s15, 3
      %p176 = pnand %p174, %p175
      %p177 = pneg %p176
      // Predicated region
      $region29: #{tpu_custom_call.1} parent=5 // pred_check
        _
      $region30: #{tpu_custom_call.1} parent=5 // pred_check_branch
        %179 = sbr.rel (%p176) target = $region32
      $region31: #{tpu_custom_call.1} parent=5 // pred_region
        %s180 = ssub.s32 %s15, 1
        %s181 = sand.u32 %s42, 1
        %s182 = scalar_lea.sflag [#allocation3], %s181
        %s183 = sand.u32 %s42, 1
        %s184 = smul.addr %s183, 32
        %s185 = scalar_lea.vmem [#allocation2], %s184
        // Predicated region
        $region33: #{tpu_custom_call.1} parent=31 // pred_check
          %p186 = pneg %p55
        $region34: #{tpu_custom_call.1} parent=31 // pred_check_branch
          %188 = sbr.rel (%p186) target = $region36
        $region35: #{tpu_custom_call.1} parent=31 // pred_region
          %190 = dma.done %s182, 512
        $region36: #{tpu_custom_call.1} parent=31 // pred_fallthru
          _
        %s191 = sand.u32 %s42, 1
        %s192 = scalar_lea.sflag [#allocation3], %s191
        %s193 = sand.u32 %s42, 1
        %s194 = smul.addr %s193, 32
        %s195 = scalar_lea.vmem [#allocation2], %s194
        %p196 = pneg %p55
        %p197 = pneg %p52
        %p198 = pneg %p76
        %p199 = pneg %p73
        %p200 = pneg %p97
        %p201 = pneg %p94
        %p202 = pneg %p125
        %p203 = pneg %p122
        %s204 = sand.u32 %s112, 1
        %s205 = scalar_lea.sflag [#allocation4], %s204
        %s206 = sand.u32 %s112, 1
        %s207 = smul.addr %s206, 8
        %s208 = scalar_lea.vmem [#allocation5], %s207
        %s209 = smul.u32 2, %s25
        %s210 = smul.u32 2, %s25
        %v211 = vld [vmem:[%s1] sm:$0xf]
        %v212 = vld [vmem:[%s185] sm:$0xff]
        %v213 = vld [vmem:[%s185 + $0x8] sm:$0xff]
        %v214 = vld [vmem:[%s185 + $0x10] sm:$0xff]
        %v215 = vld [vmem:[%s185 + $0x18] sm:$0xff]
        %v216 = vld [vmem:[%s2] sm:$0xf]
        %218 = vset.pattern.permute.xlu0 0
        %219 = vperm.xlu0 %218, %v216
        %v220 = vpop.permute.xlu0 %219
        %vm222 = vcmask 130048
        %v224 = vsel %vm222, %v211, 0
        %226 = vmatpush.msra.mxu0 0.0
        %227 = vmatpush.msra.mxu0 0.0
        %228 = vmatpush.msra.mxu0 0.0
        %229 = vmatpush.msra.mxu0 0.0
        %230 = vmatpush.msra.mxu0 0.0
        %231 = vmatpush.msra.mxu0 0.0
        %232 = vmatpush.msra.mxu0 0.0
        %233 = vmatpush.msra.mxu0 0.0
        %234 = vmatpush.msra.mxu0 0.0
        %235 = vmatpush.msra.mxu0 0.0
        %236 = vmatpush.msra.mxu0 0.0
        %237 = vmatpush.msra.mxu0 0.0
        %238 = vmatpush.msra.mxu0 0.0
        %239 = vmatpush.msra.mxu0 0.0
        %240 = vmatpush.msra.mxu0 %v214
        %241 = vmatpush.msra.mxu0 %v212
        %242 = vmatmul.f32.gmra.mxu0 %v224
        %v243 = vpop.f32.mrf.mxu0
        %v244 = vadd.f32 %v220, %v243
        %245 = vdwg.mxu0
        %246 = vmatpush.msra.mxu0 0.0
        %247 = vmatpush.msra.mxu0 0.0
        %248 = vmatpush.msra.mxu0 0.0
        %249 = vmatpush.msra.mxu0 0.0
        %250 = vmatpush.msra.mxu0 0.0
        %251 = vmatpush.msra.mxu0 0.0
        %252 = vmatpush.msra.mxu0 0.0
        %253 = vmatpush.msra.mxu0 0.0
        %254 = vmatpush.msra.mxu0 0.0
        %255 = vmatpush.msra.mxu0 0.0
        %256 = vmatpush.msra.mxu0 0.0
        %257 = vmatpush.msra.mxu0 0.0
        %258 = vmatpush.msra.mxu0 0.0
        %259 = vmatpush.msra.mxu0 0.0
        %260 = vmatpush.msra.mxu0 %v215
        %261 = vmatpush.msra.mxu0 %v213
        %262 = vmatmul.f32.gmra.mxu0 %v224
        %v263 = vpop.f32.mrf.mxu0
        %v264 = vadd.f32 %v220, %v263
        %265 = vdwg.mxu0
        %v266 = vmax.f32 %v244, 0.0
        %v267 = vmax.f32 %v264, 0.0
        %v270 = vrot.slane %v267, 4
        %vm271 = vcmask 1043456
        %v272 = vsel %vm271, %v266, %v270
        %274 = vst [vmem:[%s208] sm:$0xff] %v272
        %s275 = sand.u32 %s112, 1
        %s276 = scalar_lea.sflag [#allocation4], %s275
        %s277 = sand.u32 %s112, 1
        %s278 = smul.addr %s277, 8
        %s279 = scalar_lea.vmem [#allocation5], %s278
        // Predicated region
        $region37: #{tpu_custom_call.1} parent=31 // pred_check
          %p280 = pneg %p122
        $region38: #{tpu_custom_call.1} parent=31 // pred_check_branch
          %282 = sbr.rel (%p280) target = $region40
        $region39: #{tpu_custom_call.1} parent=31 // pred_region
          %s283 = smul.u32 2, %s25
          %285 = vsyncadd %s276, 0
          %s286 = smul.addr %s24, 2
          %s287 = sadd.s32 %s283, %s286
          %s288 = smul.addr %s287, 4
          %s289 = scalar_lea.hbm %s3, %s288
          %s291 = sshll.u32 %s279, 4
          %s292 = int_to_ptr.vmem [resolvable:$true] %s291
          %s293 = sshll.u32 %s289, 4
          %s294 = int_to_ptr.hbm [resolvable:$true] %s293
          %296 = dma.vmem_to_hbm [thread:$0]  %s292, 128, %s294, %s276
        $region40: #{tpu_custom_call.1} parent=31 // pred_fallthru
          _
      $region32: #{tpu_custom_call.1} parent=5 // pred_fallthru
        _
      %p297 = scmp.le.s32.totalorder 2, %s15
      // Predicated region
      $region41: #{tpu_custom_call.1} parent=5 // pred_check
        %p298 = pneg %p297
      $region42: #{tpu_custom_call.1} parent=5 // pred_check_branch
        %300 = sbr.rel (%p298) target = $region44
      $region43: #{tpu_custom_call.1} parent=5 // pred_region
        %s301 = ssub.s32 %s15, 2
        // Predicated region
        $region45: #{tpu_custom_call.1} parent=43 // pred_check
          %p302 = pneg %p128
        $region46: #{tpu_custom_call.1} parent=43 // pred_check_branch
          %304 = sbr.rel (%p302) target = $region48
        $region47: #{tpu_custom_call.1} parent=43 // pred_region
          %s305 = sand.u32 %s113, 1
          %s306 = scalar_lea.sflag [#allocation4], %s305
          %s307 = sand.u32 %s113, 1
          %s308 = smul.addr %s307, 8
          %s309 = scalar_lea.vmem [#allocation5], %s308
          %311 = dma.done %s306, 128
        $region48: #{tpu_custom_call.1} parent=43 // pred_fallthru
          _
      $region44: #{tpu_custom_call.1} parent=5 // pred_fallthru
        _
    $region6: #{tpu_custom_call.1} parent=1 // loop_footer
      %s19 = sadd.s32 1, %s15
    $region7: #{tpu_custom_call.1} parent=1 // loop_footer_branch
      %14 = sbr.rel target = $region3
    $region8: #{tpu_custom_call.1} parent=1 // loop_exit
      _
    %312 = vsyncpa [#allocation3], 1
    %s313 = scalar_lea.sflag [#allocation3], 1
    %314 = vsyncpa %s313, 1
    %315 = vsyncpa [#allocation4], 1
    %s316 = scalar_lea.sflag [#allocation4], 1
    %317 = vsyncpa %s316, 1

</llo_original>
